<compile_context>
chip_gen: v6e
topology: v6e:2x2x1
jax: 0.10.0
libtpu: 0.0.40
codegen_flags: <defaults>
</compile_context>

<pallas_src>
import functools

import jax
import jax.numpy as jnp
from jax import lax
from jax.experimental import pallas as pl
from jax.experimental.pallas import tpu as pltpu

EPS = 1e-5  # PyTorch default for both InstanceNorm2d and BatchNorm2d.


def _ibn_kernel(x_ref, g_ref, b_ref, out_ref, *, half1, c_blk):
    """One channel block: IN for global channels < half1, BN otherwise.

    x_ref:   (N, c_blk, HW)   g_ref/b_ref: (c_blk, 1)   out_ref: (N, c_blk, HW)
    N and HW are whole, so both norms are single-pass per block.
    """
    x = x_ref[...].astype(jnp.float32)                     # (N, Cb, HW)
    n, cb, hw = x.shape
    inv_hw = jnp.float32(1.0 / hw)
    inv_nhw = jnp.float32(1.0 / (n * hw))

    # Global channel index of each channel in this block -> IN vs BN mask.
    c0 = pl.program_id(0) * c_blk
    cidx = c0 + lax.broadcasted_iota(jnp.int32, (1, cb, 1), 1)
    is_in = cidx < half1                                    # (1, Cb, 1)

    # Pass 1: means.
    s1 = jnp.sum(x, axis=-1, keepdims=True)                 # (N, Cb, 1)
    mu_in = s1 * inv_hw                                     # per (n, c)
    mu_bn = jnp.sum(s1, axis=0, keepdims=True) * inv_nhw    # per c  (1, Cb, 1)
    mu = jnp.where(is_in, mu_in, mu_bn)                     # (N, Cb, 1)

    # Pass 2: centered (two-pass, numerically stable) biased variance.
    d = x - mu                                              # (N, Cb, HW)
    v1 = jnp.sum(d * d, axis=-1, keepdims=True)             # (N, Cb, 1)
    var_in = v1 * inv_hw
    var_bn = jnp.sum(v1, axis=0, keepdims=True) * inv_nhw   # (1, Cb, 1)
    var = jnp.where(is_in, var_in, var_bn)                  # (N, Cb, 1)

    scale = g_ref[...] * lax.rsqrt(var + EPS)               # (N, Cb, 1)
    out_ref[...] = (d * scale + b_ref[...]).astype(out_ref.dtype)


def _pick_c_blk(C, N, HW, itemsize, tile_budget_bytes):
    """Channel-block size: multiple of 8 dividing C, sized by a VMEM tile
    budget (live footprint ~ 2 double-buffered x (in + out) = 4x one tile),
    capped so the grid has >= 2 steps when C >= 16 (megacore)."""
    if C % 8 != 0:
        # Awkward channel count: take the full extent as one block (allowed
        # because block dim == array extent).  Fine for small C.
        return C
    per_c = max(1, N * HW * itemsize)
    cap = max(8, (tile_budget_bytes // per_c) // 8 * 8)
    if C >= 16:
        cap = min(cap, max(8, (C // 2) // 8 * 8))
    cap = min(cap, C)
    best = 8
    blk = 8
    while blk <= cap:
        if C % blk == 0:
            best = blk
        blk += 8
    return best


def ibn_forward(x_nchw, gamma_in, beta_in, gamma_bn, beta_bn,
                tile_budget_bytes=6 << 20):
    """x_nchw: (N, C, H, W).  gamma/beta_in: (C//2,), gamma/beta_bn: (C - C//2,)."""
    N, C, H, W = x_nchw.shape
    half1 = C // 2
    HW = H * W

    x = x_nchw.reshape(N, C, HW)
    gamma = jnp.concatenate([gamma_in, gamma_bn]).astype(jnp.float32).reshape(C, 1)
    beta = jnp.concatenate([beta_in, beta_bn]).astype(jnp.float32).reshape(C, 1)

    itemsize = jnp.dtype(x.dtype).itemsize
    c_blk = _pick_c_blk(C, N, HW, itemsize, tile_budget_bytes)
    grid = (pl.cdiv(C, c_blk),)

    # Live VMEM ~ 2 buffers x (input tile + output tile) + params + slack.
    tile_bytes = N * c_blk * HW * itemsize
    vmem_limit = int(min(max(32 << 20, 4 * tile_bytes + (2 << 20)), 48 << 20))

    kernel = functools.partial(_ibn_kernel, half1=half1, c_blk=c_blk)
    y = pl.pallas_call(
        kernel,
        out_shape=jax.ShapeDtypeStruct((N, C, HW), x.dtype),
        grid=grid,
        in_specs=[
            pl.BlockSpec((N, c_blk, HW), lambda i: (0, i, 0)),
            pl.BlockSpec((c_blk, 1), lambda i: (i, 0)),
            pl.BlockSpec((c_blk, 1), lambda i: (i, 0)),
        ],
        out_specs=pl.BlockSpec((N, c_blk, HW), lambda i: (0, i, 0)),
        compiler_params=pltpu.CompilerParams(
            dimension_semantics=("parallel",),
            vmem_limit_bytes=vmem_limit),
    )(x, gamma, beta)
    return y.reshape(N, C, H, W)


def _ibn_reference(x, gamma_in, beta_in, gamma_bn, beta_bn):
    """Pure-JAX reference matching PyTorch IBN forward (train-mode BN)."""
    C = x.shape[1]
    half1 = C // 2
    x_in, x_bn = x[:, :half1], x[:, half1:]

    mu = jnp.mean(x_in, axis=(2, 3), keepdims=True)
    var = jnp.mean((x_in - mu) ** 2, axis=(2, 3), keepdims=True)
    y_in = (x_in - mu) / jnp.sqrt(var + EPS)
    y_in = y_in * gamma_in[None, :, None, None] + beta_in[None, :, None, None]

    mu_b = jnp.mean(x_bn, axis=(0, 2, 3), keepdims=True)
    var_b = jnp.mean((x_bn - mu_b) ** 2, axis=(0, 2, 3), keepdims=True)
    y_bn = (x_bn - mu_b) / jnp.sqrt(var_b + EPS)
    y_bn = y_bn * gamma_bn[None, :, None, None] + beta_bn[None, :, None, None]

    return jnp.concatenate([y_in, y_bn], axis=1)


def _run_case(key, N, C, H, W, tile_budget_bytes=6 << 20):
    kx, k1, k2, k3, k4 = jax.random.split(key, 5)
    half1 = C // 2
    half2 = C - half1

    x = jax.random.normal(kx, (N, C, H, W), dtype=jnp.float32)
    # Non-zero mean to exercise variance numerics.
    x = x + 2.0
    gamma_in = 1.0 + 0.1 * jax.random.normal(k1, (half1,), dtype=jnp.float32)
    beta_in = 0.1 * jax.random.normal(k2, (half1,), dtype=jnp.float32)
    gamma_bn = 1.0 + 0.1 * jax.random.normal(k3, (half2,), dtype=jnp.float32)
    beta_bn = 0.1 * jax.random.normal(k4, (half2,), dtype=jnp.float32)

    out = ibn_forward(x, gamma_in, beta_in, gamma_bn, beta_bn,
                      tile_budget_bytes=tile_budget_bytes)
    out = jax.block_until_ready(out)

    ref = _ibn_reference(x, gamma_in, beta_in, gamma_bn, beta_bn)
    assert out.shape == (N, C, H, W)
    assert jnp.allclose(out, ref, atol=1e-4, rtol=1e-4), "mismatch vs reference"


if __name__ == "__main__":
    key = jax.random.PRNGKey(0)
    k_a, k_b, k_c, k_d = jax.random.split(key, 4)

    # Small canonical case: C not 8-aligned -> single full-extent block,
    # IN/BN boundary handled by the in-block channel mask.
    _run_case(k_a, N=2, C=4, H=16, W=16)

    # Odd channel count (half1=3, half2=3): boundary straddles inside a block.
    _run_case(k_b, N=2, C=6, H=8, W=8)

    # 8-aligned channels, default budget -> c_blk=16, 2 grid steps.
    _run_case(k_c, N=2, C=32, H=8, W=8)

    # Force tiny tile budget to exercise the multi-block tiled path
    # (c_blk=8, 4 grid steps; blocks 0-1 are IN, 2-3 are BN).
    _run_case(k_d, N=2, C=32, H=8, W=8, tile_budget_bytes=4096)

    print("KERNEL_OK")
</pallas_src>

<mosaic_0001>
module attributes {stable_mosaic.version = 11 : i64} {
  func.func @_ibn_kernel(%arg0: i32, %arg1: memref<2x4x256xf32, #tpu.memory_space<vmem>>, %arg2: memref<4x1xf32, #tpu.memory_space<vmem>>, %arg3: memref<4x1xf32, #tpu.memory_space<vmem>>, %arg4: memref<2x4x256xf32, #tpu.memory_space<vmem>>) attributes {dimension_semantics = [#tpu.dimension_semantics<parallel>], iteration_bounds = array<i64: 1>, scalar_prefetch = 0 : i64, scratch_operands = 0 : i64, tpu.core_type = #tpu.core_type<tc>, window_params = [{transform_indices = @transform_0, window_bounds = array<i64: 2, 4, 256>}, {transform_indices = @transform_1, window_bounds = array<i64: 4, 1>}, {transform_indices = @transform_2, window_bounds = array<i64: 4, 1>}, {transform_indices = @transform_3, window_bounds = array<i64: 2, 4, 256>}]} {
    %c0 = arith.constant 0 : index
    %c0_0 = arith.constant 0 : index
    %c0_1 = arith.constant 0 : index
    %0 = vector.load %arg1[%c0, %c0_0, %c0_1] : memref<2x4x256xf32, #tpu.memory_space<vmem>>, vector<2x4x256xf32>
    %c4_i32 = arith.constant 4 : i32
    %1 = arith.muli %arg0, %c4_i32 : i32
    %2 = tpu.iota {dimensions = array<i32: 1>} : vector<1x4x1xi32>
    %3 = vector.broadcast %1 : i32 to vector<1x4x1xi32>
    %4 = arith.addi %3, %2 : vector<1x4x1xi32>
    %c2_i32 = arith.constant 2 : i32
    %5 = vector.broadcast %c2_i32 : i32 to vector<1x4x1xi32>
    %6 = arith.cmpi slt, %4, %5 : vector<1x4x1xi32>
    %cst = arith.constant dense<0.000000e+00> : vector<2x4xf32>
    %7 = vector.multi_reduction <add>, %0, %cst [2] : vector<2x4x256xf32> to vector<2x4xf32>
    %8 = vector.shape_cast %7 : vector<2x4xf32> to vector<2x4x1xf32>
    %cst_2 = arith.constant 3.906250e-03 : f32
    %9 = vector.broadcast %cst_2 : f32 to vector<2x4x1xf32>
    %10 = arith.mulf %8, %9 : vector<2x4x1xf32>
    %cst_3 = arith.constant dense<0.000000e+00> : vector<4x1xf32>
    %11 = vector.multi_reduction <add>, %8, %cst_3 [0] : vector<2x4x1xf32> to vector<4x1xf32>
    %12 = vector.shape_cast %11 : vector<4x1xf32> to vector<1x4x1xf32>
    %cst_4 = arith.constant 0.001953125 : f32
    %13 = vector.broadcast %cst_4 : f32 to vector<1x4x1xf32>
    %14 = arith.mulf %12, %13 : vector<1x4x1xf32>
    %15 = vector.shape_cast %6 : vector<1x4x1xi1> to vector<1x4x1xi1>
    %16 = vector.broadcast %15 : vector<1x4x1xi1> to vector<2x4x1xi1>
    %17 = vector.shape_cast %14 : vector<1x4x1xf32> to vector<1x4x1xf32>
    %18 = vector.broadcast %17 : vector<1x4x1xf32> to vector<2x4x1xf32>
    %19 = arith.select %16, %10, %18 : vector<2x4x1xi1>, vector<2x4x1xf32>
    %20 = vector.broadcast %19 : vector<2x4x1xf32> to vector<2x4x256xf32>
    %21 = arith.subf %0, %20 : vector<2x4x256xf32>
    %22 = arith.mulf %21, %21 : vector<2x4x256xf32>
    %cst_5 = arith.constant dense<0.000000e+00> : vector<2x4xf32>
    %23 = vector.multi_reduction <add>, %22, %cst_5 [2] : vector<2x4x256xf32> to vector<2x4xf32>
    %24 = vector.shape_cast %23 : vector<2x4xf32> to vector<2x4x1xf32>
    %cst_6 = arith.constant 3.906250e-03 : f32
    %25 = vector.broadcast %cst_6 : f32 to vector<2x4x1xf32>
    %26 = arith.mulf %24, %25 : vector<2x4x1xf32>
    %cst_7 = arith.constant dense<0.000000e+00> : vector<4x1xf32>
    %27 = vector.multi_reduction <add>, %24, %cst_7 [0] : vector<2x4x1xf32> to vector<4x1xf32>
    %28 = vector.shape_cast %27 : vector<4x1xf32> to vector<1x4x1xf32>
    %cst_8 = arith.constant 0.001953125 : f32
    %29 = vector.broadcast %cst_8 : f32 to vector<1x4x1xf32>
    %30 = arith.mulf %28, %29 : vector<1x4x1xf32>
    %31 = vector.shape_cast %6 : vector<1x4x1xi1> to vector<1x4x1xi1>
    %32 = vector.broadcast %31 : vector<1x4x1xi1> to vector<2x4x1xi1>
    %33 = vector.shape_cast %30 : vector<1x4x1xf32> to vector<1x4x1xf32>
    %34 = vector.broadcast %33 : vector<1x4x1xf32> to vector<2x4x1xf32>
    %35 = arith.select %32, %26, %34 : vector<2x4x1xi1>, vector<2x4x1xf32>
    %c0_9 = arith.constant 0 : index
    %c0_10 = arith.constant 0 : index
    %36 = vector.load %arg2[%c0_9, %c0_10] : memref<4x1xf32, #tpu.memory_space<vmem>>, vector<4x1xf32>
    %cst_11 = arith.constant 9.99999974E-6 : f32
    %37 = vector.broadcast %cst_11 : f32 to vector<2x4x1xf32>
    %38 = arith.addf %35, %37 : vector<2x4x1xf32>
    %39 = math.rsqrt %38 : vector<2x4x1xf32>
    %40 = vector.shape_cast %36 : vector<4x1xf32> to vector<1x4x1xf32>
    %41 = vector.broadcast %40 : vector<1x4x1xf32> to vector<2x4x1xf32>
    %42 = arith.mulf %41, %39 : vector<2x4x1xf32>
    %43 = vector.broadcast %42 : vector<2x4x1xf32> to vector<2x4x256xf32>
    %44 = arith.mulf %21, %43 : vector<2x4x256xf32>
    %c0_12 = arith.constant 0 : index
    %c0_13 = arith.constant 0 : index
    %45 = vector.load %arg3[%c0_12, %c0_13] : memref<4x1xf32, #tpu.memory_space<vmem>>, vector<4x1xf32>
    %46 = vector.shape_cast %45 : vector<4x1xf32> to vector<1x4x1xf32>
    %47 = vector.broadcast %46 : vector<1x4x1xf32> to vector<2x4x256xf32>
    %48 = arith.addf %44, %47 : vector<2x4x256xf32>
    %c0_14 = arith.constant 0 : index
    %c0_15 = arith.constant 0 : index
    %c0_16 = arith.constant 0 : index
    %49 = vector.load %arg4[%c0_14, %c0_15, %c0_16] : memref<2x4x256xf32, #tpu.memory_space<vmem>>, vector<2x4x256xf32>
    tpu.vector_store %arg4[%c0_14, %c0_15, %c0_16], %48 {strides = array<i32>} : memref<2x4x256xf32, #tpu.memory_space<vmem>>, vector<2x4x256xf32>,
    return
  }
  func.func @transform_0(%arg0: i32) -> (i32, i32, i32) {
    %c0_i32 = arith.constant 0 : i32
    %c0_i32_0 = arith.constant 0 : i32
    %c0_i32_1 = arith.constant 0 : i32
    return %c0_i32, %arg0, %c0_i32_0 : i32, i32, i32
  }
  func.func @transform_1(%arg0: i32) -> (i32, i32) {
    %c0_i32 = arith.constant 0 : i32
    %c0_i32_0 = arith.constant 0 : i32
    return %arg0, %c0_i32 : i32, i32
  }
  func.func @transform_2(%arg0: i32) -> (i32, i32) {
    %c0_i32 = arith.constant 0 : i32
    %c0_i32_0 = arith.constant 0 : i32
    return %arg0, %c0_i32 : i32, i32
  }
  func.func @transform_3(%arg0: i32) -> (i32, i32, i32) {
    %c0_i32 = arith.constant 0 : i32
    %c0_i32_0 = arith.constant 0 : i32
    %c0_i32_1 = arith.constant 0 : i32
    return %c0_i32, %arg0, %c0_i32_0 : i32, i32, i32
  }
}

</mosaic_0001>

<llo_original>
// kernel: tpu_custom_call.1
$region0: #{tpu_custom_call.1}
  #allocation0 [shape = 'u32[]', space=smem, size = 0x4, offset = 0x4, fixed_abs, tag = 'smem constant byte address 0x4 - core index']
  #allocation1 [shape = 'u32[144,128]{1,0:T(1,128)}', space=vmem, size = 0x12000, scoped, tag = 'internal scratch']
  %s0 = inlined_call_operand.hbm [shape: f32[2,4,256], index: 0, kind: input, shape index: {}]
  %s1 = inlined_call_operand.vmem [shape: f32[4,1], index: 1, kind: input, shape index: {}]
  %s2 = inlined_call_operand.vmem [shape: f32[4,1], index: 2, kind: input, shape index: {}]
  %s3 = inlined_call_operand.hbm [shape: f32[2,4,256], index: 3, kind: output, shape index: {}]
  %s4 = sld [smem:[#allocation0]]
  $region26: #{tpu_custom_call.1} parent=0
    _
  %s6 = ssub.s32 1, %s4
  %s7 = scalar_select 0, %s6, %s4
  $region1: #{tpu_custom_call.1} parent=0
    #allocation2 [shape = 'u8[8192]{0}', space=vmem, size = 0x2000, scoped, tag = 'input window, operand 0, single buffered']
    #allocation3 [shape = 's32[1]{0}', space=sflag, size = 0x4, scoped, tag = 'scoped memory for tpu_custom_call.1']
    #allocation4 [shape = 's32[1]{0}', space=sflag, size = 0x4, scoped, tag = 'scoped memory for tpu_custom_call.1']
    #allocation5 [shape = 'u8[8192]{0}', space=vmem, size = 0x2000, scoped, tag = 'output window, operand 0, single buffered']
    %8 = vsyncpa [#allocation3], 0
    %9 = vsyncpa [#allocation4], 0
    // Predicated region
    $region2: #{tpu_custom_call.1} parent=1 // pred_check
      _
    $region3: #{tpu_custom_call.1} parent=1 // pred_check_branch
      %11 = sbr.rel (0) target = $region5
    $region4: #{tpu_custom_call.1} parent=1 // pred_region
      %s13 = ssub.s32 256, 256
      %14 = vsyncadd [#allocation3], %s13
      %s15 = sshll.u32 [#allocation2], 4
      %s16 = int_to_ptr.vmem [resolvable:$true] %s15
      %21 = dma.hbm_to_vmem [thread:$0]  %s0, 256, %s16, [#allocation3], 128, 128, 8
    $region5: #{tpu_custom_call.1} parent=1 // pred_fallthru
      _
    // Predicated region
    $region6: #{tpu_custom_call.1} parent=1 // pred_check
      _
    $region7: #{tpu_custom_call.1} parent=1 // pred_check_branch
      %23 = sbr.rel (0) target = $region9
    $region8: #{tpu_custom_call.1} parent=1 // pred_region
      _
    $region9: #{tpu_custom_call.1} parent=1 // pred_fallthru
      _
    // Predicated region
    $region10: #{tpu_custom_call.1} parent=1 // pred_check
      _
    $region11: #{tpu_custom_call.1} parent=1 // pred_check_branch
      %25 = sbr.rel (0) target = $region13
    $region12: #{tpu_custom_call.1} parent=1 // pred_region
      _
    $region13: #{tpu_custom_call.1} parent=1 // pred_fallthru
      _
    // Predicated region
    $region14: #{tpu_custom_call.1} parent=1 // pred_check
      _
    $region15: #{tpu_custom_call.1} parent=1 // pred_check_branch
      %27 = sbr.rel (0) target = $region17
    $region16: #{tpu_custom_call.1} parent=1 // pred_region
      %28 = dma.done [#allocation3], 256
    $region17: #{tpu_custom_call.1} parent=1 // pred_fallthru
      _
    %v29 = vld [vmem:[#allocation2] sm:$0xff]
    %v30 = vld [vmem:[#allocation2 + $0x8] sm:$0xff]
    %s31 = smul.u32 0, 4
    %v32 = vlaneseq
    %v33 = vshrl.u32 %v32, 7
    %v34 = vstv %s31
    %v35 = vadd.s32 %v34, %v33
    %vm36 = vcmp.lt.s32.totalorder %v35, 2
    %v39 = vcombine.high %v29, %v29
    %v40 = vcombine.high %v30, %v30
    %vm43 = vcmask 1043456
    %v44 = vsel %vm43, %v29, 0.0
    %v45 = vsel %vm43, %v39, 0.0
    %v46 = vadd.f32 %v44, %v45
    %47 = vadd.xlane.f32.xlu0 %v46
    %v48 = vpop.xlane.xlu0 %47
    %v49 = vsel %vm43, %v30, 0.0
    %v50 = vsel %vm43, %v40, 0.0
    %v51 = vadd.f32 %v49, %v50
    %52 = vadd.xlane.f32.xlu0 %v51
    %v53 = vpop.xlane.xlu0 %52
    %v54 = vmul.f32 %v48, 0.00390625
    %v55 = vmul.f32 %v53, 0.00390625
    %v56 = vsel %vm43, %v48, 0.0
    %v57 = vsel %vm43, %v53, 0.0
    %v58 = vadd.f32 %v56, %v57
    %v59 = vmul.f32 %v58, 0.001953125
    %v60 = vsel %vm36, 1, 0
    %vm61 = vcmp.eq.s32.totalorder %v60, 1
    %v62 = vsel %vm61, %v54, %v59
    %v63 = vsel %vm61, %v55, %v59
    %v67 = vunpack.c.l.s4 839922192
    %v68 = vunpack.c.0.s8 %v67
    %v69 = vlaneseq
    %v70 = vshrl.u32 %v69, 7
    %v71 = vsub.s32 %v68, %v70
    %v72 = vrot.slane %v62, %v71
    %v74 = vunpack.c.l.s4 839922192
    %v75 = vunpack.c.0.s8 %v74
    %v76 = vlaneseq
    %v77 = vshrl.u32 %v76, 7
    %v78 = vsub.s32 %v75, %v77
    %v79 = vrot.slane %v63, %v78
    %v82 = vsub.f32 %v29, %v72
    %v83 = vsub.f32 %v30, %v79
    %v84 = vmul.f32 %v82, %v82
    %v85 = vmul.f32 %v83, %v83
    %v88 = vcombine.high %v84, %v84
    %v89 = vcombine.high %v85, %v85
    %v92 = vsel %vm43, %v84, 0.0
    %v93 = vsel %vm43, %v88, 0.0
    %v94 = vadd.f32 %v92, %v93
    %95 = vadd.xlane.f32.xlu0 %v94
    %v96 = vpop.xlane.xlu0 %95
    %v97 = vsel %vm43, %v85, 0.0
    %v98 = vsel %vm43, %v89, 0.0
    %v99 = vadd.f32 %v97, %v98
    %100 = vadd.xlane.f32.xlu0 %v99
    %v101 = vpop.xlane.xlu0 %100
    %v102 = vmul.f32 %v96, 0.00390625
    %v103 = vmul.f32 %v101, 0.00390625
    %v104 = vsel %vm43, %v96, 0.0
    %v105 = vsel %vm43, %v101, 0.0
    %v106 = vadd.f32 %v104, %v105
    %v107 = vmul.f32 %v106, 0.001953125
    %v108 = vsel %vm61, %v102, %v107
    %v109 = vsel %vm61, %v103, %v107
    %v110 = vld [vmem:[%s1] sm:$0xf]
    %v111 = vadd.f32 %v108, 1e-05
    %v112 = vadd.f32 %v109, 1e-05
    %v113 = vrsqrt.pop %v111
    %v114 = vrsqrt.pop %v112
    %v115 = vmul.f32 %v110, %v113
    %v116 = vmul.f32 %v110, %v114
    %118 = vset.pattern.permute.xlu0 0
    %119 = vperm.xlu0 %118, %v115
    %v120 = vpop.permute.xlu0 %119
    %122 = vset.pattern.permute.xlu0 0
    %123 = vperm.xlu0 %122, %v116
    %v124 = vpop.permute.xlu0 %123
    %v126 = vunpack.c.l.s4 839922192
    %v127 = vunpack.c.0.s8 %v126
    %v128 = vlaneseq
    %v129 = vshrl.u32 %v128, 7
    %v130 = vsub.s32 %v127, %v129
    %v131 = vrot.slane %v120, %v130
    %v133 = vunpack.c.l.s4 839922192
    %v134 = vunpack.c.0.s8 %v133
    %v135 = vlaneseq
    %v136 = vshrl.u32 %v135, 7
    %v137 = vsub.s32 %v134, %v136
    %v138 = vrot.slane %v124, %v137
    %v141 = vmul.f32 %v82, %v131
    %v142 = vmul.f32 %v83, %v138
    %v143 = vld [vmem:[%s2] sm:$0xf]
    %145 = vset.pattern.permute.xlu0 0
    %146 = vperm.xlu0 %145, %v143
    %v147 = vpop.permute.xlu0 %146
    %v149 = vunpack.c.l.s4 839922192
    %v150 = vunpack.c.0.s8 %v149
    %v151 = vlaneseq
    %v152 = vshrl.u32 %v151, 7
    %v153 = vsub.s32 %v150, %v152
    %v154 = vrot.slane %v147, %v153
    %v156 = vadd.f32 %v141, %v154
    %v157 = vadd.f32 %v142, %v154
    %158 = vst [vmem:[#allocation5] sm:$0xff] %v156
    %159 = vst [vmem:[#allocation5 + $0x8] sm:$0xff] %v157
    // Predicated region
    $region18: #{tpu_custom_call.1} parent=1 // pred_check
      _
    $region19: #{tpu_custom_call.1} parent=1 // pred_check_branch
      %161 = sbr.rel (0) target = $region21
    $region20: #{tpu_custom_call.1} parent=1 // pred_region
      %s163 = ssub.s32 256, 256
      %164 = vsyncadd [#allocation4], %s163
      %s165 = sshll.u32 [#allocation5], 4
      %s166 = int_to_ptr.vmem [resolvable:$true] %s165
      %171 = dma.vmem_to_hbm [thread:$0]  %s166, 256, %s3, [#allocation4], 128, 128, 8
    $region21: #{tpu_custom_call.1} parent=1 // pred_fallthru
      _
    // Predicated region
    $region22: #{tpu_custom_call.1} parent=1 // pred_check
      _
    $region23: #{tpu_custom_call.1} parent=1 // pred_check_branch
      %173 = sbr.rel (0) target = $region25
    $region24: #{tpu_custom_call.1} parent=1 // pred_region
      %174 = dma.done [#allocation4], 256
    $region25: #{tpu_custom_call.1} parent=1 // pred_fallthru
      _
    %175 = vsyncpa [#allocation3], 1
    %176 = vsyncpa [#allocation4], 1

</llo_original>
